<compile_context>
chip_gen: v6e
topology: v6e:2x2x1
jax: 0.10.0
libtpu: 0.0.40
codegen_flags: <defaults>
</compile_context>

<pallas_src>
import functools

import jax
import jax.numpy as jnp
from jax.experimental import pallas as pl
from jax.experimental.pallas import tpu as pltpu

_EPS = 1e-20


def _gumbel_sample_kernel(x_ref, u_ref, o_ref, *, tau, use_sigmoid, use_reg_max):
    x = x_ref[...].astype(jnp.float32)
    eps = jnp.float32(_EPS)
    one = jnp.float32(1.0)

    if use_sigmoid:
        # manual sigmoid: single exp + divide (avoids the two-branch select that
        # jax.nn.sigmoid's stable lowering can emit)
        xn = one / (one + jnp.exp(-x))
    else:
        # per-(n,c) row min/max normalization; cross-lane reduces go to the XLU
        # slot and are effectively free next to the EUP work below.
        row_max = jnp.max(x, axis=-1, keepdims=True)
        row_min = jnp.min(x, axis=-1, keepdims=True)
        xn = (x - row_min) / (row_max - row_min + eps)
        if use_reg_max:
            xn = xn * jnp.minimum(row_max, one)

    # Single Logistic(0,1) draw replaces the difference of two Gumbel draws.
    u = u_ref[...].astype(jnp.float32)
    d = jnp.log(u + eps) - jnp.log(one - u + eps)

    inv_tau = jnp.float32(1.0 / tau)
    z = (jnp.float32(2.0) * xn - one + d) * inv_tau

    # softmax over K=2, first component == sigmoid(z); manual form keeps it to
    # one exp + one divide.
    # TODO(synk): on real TPU, pl.reciprocal(1 + exp(-z), approx=True) would use
    # the free EUP vrcp slot, but it has no CPU/interpret lowering.
    o_ref[...] = (one / (one + jnp.exp(-z))).astype(o_ref.dtype)


def gumbel_sample(x, noise_key, *, tau=1.0, use_sigmoid=False, use_reg_max=False):
    """x: (N, C, H, W) array -> mask of same shape/dtype, values in (0, 1)."""
    N, C, H, W = x.shape
    rows, cols = N * C, H * W
    assert rows % 8 == 0 and cols % 128 == 0, "synthetic example keeps tile-aligned shapes"

    # Keep the native dtype (e.g. bf16) through the kernel; cast to f32 inside.
    x2 = x.reshape(rows, cols)
    u2 = jax.random.uniform(noise_key, (rows, cols), dtype=jnp.float32)  # [0, 1)

    # VMEM-budget-aware row block: size against ~24 MiB so the same choice is
    # safe on v7x (64 MiB physical / 32 MiB scoped) as well as v5e/v6e.
    in_bytes = jnp.dtype(x2.dtype).itemsize
    out_bytes = in_bytes
    noise_bytes = 4
    bytes_per_row = cols * (in_bytes + noise_bytes + out_bytes) * 2  # double-buffered
    vmem_budget = 24 * 1024 * 1024
    row_block = max(8, min(rows, (vmem_budget // bytes_per_row) // 8 * 8))
    while rows % row_block != 0:  # keep the grid exact (terminates at 8)
        row_block -= 8
    grid = (rows // row_block,)

    kernel = functools.partial(
        _gumbel_sample_kernel,
        tau=float(tau),
        use_sigmoid=bool(use_sigmoid),
        use_reg_max=bool(use_reg_max),
    )

    out2 = pl.pallas_call(
        kernel,
        out_shape=jax.ShapeDtypeStruct((rows, cols), x2.dtype),
        grid_spec=pltpu.PrefetchScalarGridSpec(
            num_scalar_prefetch=0,
            grid=grid,
            in_specs=[
                pl.BlockSpec((row_block, cols), lambda i: (i, 0)),
                pl.BlockSpec((row_block, cols), lambda i: (i, 0)),
            ],
            out_specs=pl.BlockSpec((row_block, cols), lambda i: (i, 0)),
        ),
        compiler_params=pltpu.CompilerParams(
            # grid steps are fully independent -> let v7x's two TCs split them
            dimension_semantics=("parallel",),
            vmem_limit_bytes=32 * 1024 * 1024,
        ),
    )(x2, u2)

    return out2.reshape(N, C, H, W)


if __name__ == "__main__":
    key = jax.random.PRNGKey(0)
    kx, ku = jax.random.split(key)
    x = jax.random.normal(kx, (2, 4, 16, 16), dtype=jnp.float32)

    mask = gumbel_sample(x, ku, tau=1.0, use_sigmoid=False, use_reg_max=False)
    jax.block_until_ready(mask)

    assert mask.shape == x.shape
    assert mask.dtype == x.dtype
    # mask is the first softmax component over K=2 -> strictly in (0, 1)
    assert bool(jnp.all(mask >= 0.0)) and bool(jnp.all(mask <= 1.0))

    print("KERNEL_OK")
</pallas_src>

<mosaic_0001>
module attributes {stable_mosaic.version = 11 : i64} {
  func.func @_gumbel_sample_kernel(%arg0: i32, %arg1: memref<8x256xf32, #tpu.memory_space<vmem>>, %arg2: memref<8x256xf32, #tpu.memory_space<vmem>>, %arg3: memref<8x256xf32, #tpu.memory_space<vmem>>) attributes {dimension_semantics = [#tpu.dimension_semantics<parallel>], iteration_bounds = array<i64: 1>, scalar_prefetch = 0 : i64, scratch_operands = 0 : i64, tpu.core_type = #tpu.core_type<tc>, window_params = [{transform_indices = @transform_0, window_bounds = array<i64: 8, 256>}, {transform_indices = @transform_1, window_bounds = array<i64: 8, 256>}, {transform_indices = @transform_2, window_bounds = array<i64: 8, 256>}]} {
    %c0 = arith.constant 0 : index
    %c0_0 = arith.constant 0 : index
    %0 = vector.load %arg1[%c0, %c0_0] : memref<8x256xf32, #tpu.memory_space<vmem>>, vector<8x256xf32>
    %cst = arith.constant dense<0xFF800000> : vector<8xf32>
    %1 = vector.multi_reduction <maximumf>, %0, %cst [1] : vector<8x256xf32> to vector<8xf32>
    %2 = vector.shape_cast %1 : vector<8xf32> to vector<8x1xf32>
    %cst_1 = arith.constant dense<0x7F800000> : vector<8xf32>
    %3 = vector.multi_reduction <minimumf>, %0, %cst_1 [1] : vector<8x256xf32> to vector<8xf32>
    %4 = vector.shape_cast %3 : vector<8xf32> to vector<8x1xf32>
    %5 = vector.broadcast %4 : vector<8x1xf32> to vector<8x256xf32>
    %6 = arith.subf %0, %5 : vector<8x256xf32>
    %7 = arith.subf %2, %4 : vector<8x1xf32>
    %cst_2 = arith.constant 9.99999968E-21 : f32
    %8 = vector.broadcast %cst_2 : f32 to vector<8x1xf32>
    %9 = arith.addf %7, %8 : vector<8x1xf32>
    %10 = vector.broadcast %9 : vector<8x1xf32> to vector<8x256xf32>
    %11 = arith.divf %6, %10 : vector<8x256xf32>
    %c0_3 = arith.constant 0 : index
    %c0_4 = arith.constant 0 : index
    %12 = vector.load %arg2[%c0_3, %c0_4] : memref<8x256xf32, #tpu.memory_space<vmem>>, vector<8x256xf32>
    %cst_5 = arith.constant 9.99999968E-21 : f32
    %13 = vector.broadcast %cst_5 : f32 to vector<8x256xf32>
    %14 = arith.addf %12, %13 : vector<8x256xf32>
    %15 = math.log %14 : vector<8x256xf32>
    %cst_6 = arith.constant 1.000000e+00 : f32
    %16 = vector.broadcast %cst_6 : f32 to vector<8x256xf32>
    %17 = arith.subf %16, %12 : vector<8x256xf32>
    %cst_7 = arith.constant 9.99999968E-21 : f32
    %18 = vector.broadcast %cst_7 : f32 to vector<8x256xf32>
    %19 = arith.addf %17, %18 : vector<8x256xf32>
    %20 = math.log %19 : vector<8x256xf32>
    %21 = arith.subf %15, %20 : vector<8x256xf32>
    %cst_8 = arith.constant 2.000000e+00 : f32
    %22 = vector.broadcast %cst_8 : f32 to vector<8x256xf32>
    %23 = arith.mulf %22, %11 : vector<8x256xf32>
    %cst_9 = arith.constant 1.000000e+00 : f32
    %24 = vector.broadcast %cst_9 : f32 to vector<8x256xf32>
    %25 = arith.subf %23, %24 : vector<8x256xf32>
    %26 = arith.addf %25, %21 : vector<8x256xf32>
    %cst_10 = arith.constant 1.000000e+00 : f32
    %27 = vector.broadcast %cst_10 : f32 to vector<8x256xf32>
    %28 = arith.mulf %26, %27 : vector<8x256xf32>
    %cst_11 = arith.constant 0.000000e+00 : f32
    %29 = vector.broadcast %cst_11 : f32 to vector<8x256xf32>
    %30 = arith.subf %29, %28 : vector<8x256xf32>
    %31 = math.exp %30 : vector<8x256xf32>
    %cst_12 = arith.constant 1.000000e+00 : f32
    %32 = vector.broadcast %cst_12 : f32 to vector<8x256xf32>
    %33 = arith.addf %32, %31 : vector<8x256xf32>
    %cst_13 = arith.constant 1.000000e+00 : f32
    %34 = vector.broadcast %cst_13 : f32 to vector<8x256xf32>
    %35 = arith.divf %34, %33 : vector<8x256xf32>
    %c0_14 = arith.constant 0 : index
    %c0_15 = arith.constant 0 : index
    %36 = vector.load %arg3[%c0_14, %c0_15] : memref<8x256xf32, #tpu.memory_space<vmem>>, vector<8x256xf32>
    tpu.vector_store %arg3[%c0_14, %c0_15], %35 {strides = array<i32>} : memref<8x256xf32, #tpu.memory_space<vmem>>, vector<8x256xf32>,
    return
  }
  func.func @transform_0(%arg0: i32) -> (i32, i32) {
    %c0_i32 = arith.constant 0 : i32
    %c0_i32_0 = arith.constant 0 : i32
    return %arg0, %c0_i32 : i32, i32
  }
  func.func @transform_1(%arg0: i32) -> (i32, i32) {
    %c0_i32 = arith.constant 0 : i32
    %c0_i32_0 = arith.constant 0 : i32
    return %arg0, %c0_i32 : i32, i32
  }
  func.func @transform_2(%arg0: i32) -> (i32, i32) {
    %c0_i32 = arith.constant 0 : i32
    %c0_i32_0 = arith.constant 0 : i32
    return %arg0, %c0_i32 : i32, i32
  }
}

</mosaic_0001>

<llo_original>
// kernel: tpu_custom_call.1
$region0: #{tpu_custom_call.1}
  #allocation0 [shape = 'u32[]', space=smem, size = 0x4, offset = 0x4, fixed_abs, tag = 'smem constant byte address 0x4 - core index']
  #allocation1 [shape = 'u32[144,128]{1,0:T(1,128)}', space=vmem, size = 0x12000, scoped, tag = 'internal scratch']
  %s0 = inlined_call_operand.hbm [shape: f32[8,256], index: 0, kind: input, shape index: {}]
  %s1 = inlined_call_operand.hbm [shape: f32[8,256], index: 1, kind: input, shape index: {}]
  %s2 = inlined_call_operand.hbm [shape: f32[8,256], index: 2, kind: output, shape index: {}]
  %s3 = sld [smem:[#allocation0]]
  $region26: #{tpu_custom_call.1} parent=0
    _
  %s5 = ssub.s32 1, %s3
  %s6 = scalar_select 0, %s5, %s3
  $region1: #{tpu_custom_call.1} parent=0
    #allocation2 [shape = 'u8[8192]{0}', space=vmem, size = 0x2000, scoped, tag = 'input window, operand 0, single buffered']
    #allocation3 [shape = 's32[1]{0}', space=sflag, size = 0x4, scoped, tag = 'scoped memory for tpu_custom_call.1']
    #allocation4 [shape = 's32[1]{0}', space=sflag, size = 0x4, scoped, tag = 'scoped memory for tpu_custom_call.1']
    #allocation5 [shape = 'u8[8192]{0}', space=vmem, size = 0x2000, scoped, tag = 'input window, operand 1, single buffered']
    #allocation6 [shape = 's32[1]{0}', space=sflag, size = 0x4, scoped, tag = 'scoped memory for tpu_custom_call.1']
    #allocation7 [shape = 'u8[8192]{0}', space=vmem, size = 0x2000, scoped, tag = 'output window, operand 0, single buffered']
    %7 = vsyncpa [#allocation3], 0
    %8 = vsyncpa [#allocation6], 0
    %9 = vsyncpa [#allocation4], 0
    // Predicated region
    $region2: #{tpu_custom_call.1} parent=1 // pred_check
      _
    $region3: #{tpu_custom_call.1} parent=1 // pred_check_branch
      %11 = sbr.rel (0) target = $region5
    $region4: #{tpu_custom_call.1} parent=1 // pred_region
      %s13 = ssub.s32 256, 256
      %14 = vsyncadd [#allocation3], %s13
      %s16 = sshll.u32 [#allocation2], 4
      %s17 = int_to_ptr.vmem [resolvable:$true] %s16
      %19 = dma.hbm_to_vmem [thread:$0]  %s0, 256, %s17, [#allocation3]
    $region5: #{tpu_custom_call.1} parent=1 // pred_fallthru
      _
    // Predicated region
    $region6: #{tpu_custom_call.1} parent=1 // pred_check
      _
    $region7: #{tpu_custom_call.1} parent=1 // pred_check_branch
      %21 = sbr.rel (0) target = $region9
    $region8: #{tpu_custom_call.1} parent=1 // pred_region
      %s23 = ssub.s32 256, 256
      %24 = vsyncadd [#allocation6], %s23
      %s26 = sshll.u32 [#allocation5], 4
      %s27 = int_to_ptr.vmem [resolvable:$true] %s26
      %29 = dma.hbm_to_vmem [thread:$0]  %s1, 256, %s27, [#allocation6]
    $region9: #{tpu_custom_call.1} parent=1 // pred_fallthru
      _
    // Predicated region
    $region10: #{tpu_custom_call.1} parent=1 // pred_check
      _
    $region11: #{tpu_custom_call.1} parent=1 // pred_check_branch
      %31 = sbr.rel (0) target = $region13
    $region12: #{tpu_custom_call.1} parent=1 // pred_region
      %32 = dma.done [#allocation3], 256
    $region13: #{tpu_custom_call.1} parent=1 // pred_fallthru
      _
    // Predicated region
    $region14: #{tpu_custom_call.1} parent=1 // pred_check
      _
    $region15: #{tpu_custom_call.1} parent=1 // pred_check_branch
      %34 = sbr.rel (0) target = $region17
    $region16: #{tpu_custom_call.1} parent=1 // pred_region
      %35 = dma.done [#allocation6], 256
    $region17: #{tpu_custom_call.1} parent=1 // pred_fallthru
      _
    %v36 = vld [vmem:[#allocation2] sm:$0xff]
    %v37 = vld [vmem:[#allocation2 + $0x8] sm:$0xff]
    %v38 = vmax.f32 %v36, %v37
    %39 = vmax.xlane.f32.xlu0 %v38
    %v40 = vpop.xlane.xlu0 %39
    %v41 = vmin.f32 %v36, %v37
    %42 = vmin.xlane.f32.xlu0 %v41
    %v43 = vpop.xlane.xlu0 %42
    %v44 = vsub.f32 %v36, %v43
    %v45 = vsub.f32 %v37, %v43
    %v46 = vsub.f32 %v40, %v43
    %v47 = vadd.f32 %v46, 1e-20
    %v48 = vrcp.pop %v47
    %v49 = vmul.f32 %v44, %v48
    %v50 = vmul.f32 %v45, %v48
    %v51 = vld [vmem:[#allocation5] sm:$0xff]
    %v52 = vld [vmem:[#allocation5 + $0x8] sm:$0xff]
    %v53 = vadd.f32 %v51, 1e-20
    %v54 = vadd.f32 %v52, 1e-20
    %v55 = vlog2.pop %v53
    %v56 = vmul.f32 %v55, 0.6931472
    %v57 = vlog2.pop %v54
    %v58 = vmul.f32 %v57, 0.6931472
    %v59 = vsub.f32 1.0, %v51
    %v60 = vsub.f32 1.0, %v52
    %v61 = vadd.f32 %v59, 1e-20
    %v62 = vadd.f32 %v60, 1e-20
    %v63 = vlog2.pop %v61
    %v64 = vmul.f32 %v63, 0.6931472
    %v65 = vlog2.pop %v62
    %v66 = vmul.f32 %v65, 0.6931472
    %v67 = vsub.f32 %v56, %v64
    %v68 = vsub.f32 %v58, %v66
    %v69 = vmul.f32 %v49, 2.0
    %v70 = vmul.f32 %v50, 2.0
    %v71 = vsub.f32 %v69, 1.0
    %v72 = vsub.f32 %v70, 1.0
    %v73 = vadd.f32 %v71, %v67
    %v74 = vadd.f32 %v72, %v68
    %v75 = vsub.f32 0.0, %v73
    %v76 = vsub.f32 0.0, %v74
    %v77 = vmul.f32 %v75, 1.442695
    %v78 = vpow.pop %v77
    %v79 = vmul.f32 %v76, 1.442695
    %v80 = vpow.pop %v79
    %v81 = vadd.f32 %v78, 1.0
    %v82 = vadd.f32 %v80, 1.0
    %v83 = vrcp.pop %v81
    %v84 = vmul.f32 1.0, %v83
    %v85 = vrcp.pop %v82
    %v86 = vmul.f32 1.0, %v85
    %87 = vst [vmem:[#allocation7] sm:$0xff] %v84
    %88 = vst [vmem:[#allocation7 + $0x8] sm:$0xff] %v86
    // Predicated region
    $region18: #{tpu_custom_call.1} parent=1 // pred_check
      _
    $region19: #{tpu_custom_call.1} parent=1 // pred_check_branch
      %90 = sbr.rel (0) target = $region21
    $region20: #{tpu_custom_call.1} parent=1 // pred_region
      %s92 = ssub.s32 256, 256
      %93 = vsyncadd [#allocation4], %s92
      %s95 = sshll.u32 [#allocation7], 4
      %s96 = int_to_ptr.vmem [resolvable:$true] %s95
      %98 = dma.vmem_to_hbm [thread:$0]  %s96, 256, %s2, [#allocation4]
    $region21: #{tpu_custom_call.1} parent=1 // pred_fallthru
      _
    // Predicated region
    $region22: #{tpu_custom_call.1} parent=1 // pred_check
      _
    $region23: #{tpu_custom_call.1} parent=1 // pred_check_branch
      %100 = sbr.rel (0) target = $region25
    $region24: #{tpu_custom_call.1} parent=1 // pred_region
      %101 = dma.done [#allocation4], 256
    $region25: #{tpu_custom_call.1} parent=1 // pred_fallthru
      _
    %102 = vsyncpa [#allocation3], 1
    %103 = vsyncpa [#allocation6], 1
    %104 = vsyncpa [#allocation4], 1

</llo_original>
